<compile_context>
chip_gen: v5e
topology: v5e:2x2
jax: 0.10.0
libtpu: 0.0.40
codegen_flags: <defaults>
</compile_context>

<pallas_src>
import functools

import jax
import jax.numpy as jnp
from jax.experimental import pallas as pl
from jax.experimental.pallas import tpu as pltpu

# f32 matmuls everywhere (kernel and reference) take the accurate multi-pass MXU /
# HIGHEST-precision path, so Pallas output matches the pure-JAX reference to ~1e-6.
jax.config.update("jax_default_matmul_precision", "highest")

BN_EPS = 1e-5          # PyTorch BatchNorm1d default eps
_LANES = 128           # TPU lane width
_HIGH = jax.lax.Precision.HIGHEST


# ----------------------------------------------------------------------------------
# One-time parameter packing (hoisted out of the hot path)
# ----------------------------------------------------------------------------------
def prepare_params(w1, b1, w2, b2, wc, bc):
    """Pack all parameters into a single lane-padded f32 slab.

    Row layout (lane offset always 0, sublane-aligned when C % 8 == 0):
      rows [0   ,  C) : W1^T   (C x C)
      rows [C   , 2C) : W2^T   (C x C)
      rows [2C  , 3C) : Wc^T   (C x O)
      row   3C        : bc     (1 x O)
    b1/b2 are dropped: under training-mode BatchNorm the mean subtraction cancels any
    constant per-feature bias exactly.
    """
    del b1, b2
    w1 = jnp.asarray(w1, jnp.float32)
    w2 = jnp.asarray(w2, jnp.float32)
    wc = jnp.asarray(wc, jnp.float32)
    bc = jnp.asarray(bc, jnp.float32)
    C = w1.shape[0]
    O = wc.shape[0]
    width = max(_LANES, pl.cdiv(max(C, O), _LANES) * _LANES)
    rows = ((3 * C + 1 + 7) // 8) * 8          # sublane-aligned row count
    packed = jnp.zeros((rows, width), jnp.float32)
    packed = packed.at[0:C, 0:C].set(w1.T)
    packed = packed.at[C:2 * C, 0:C].set(w2.T)
    packed = packed.at[2 * C:3 * C, 0:O].set(wc.T)
    packed = packed.at[3 * C, 0:O].set(bc)
    return packed


# ----------------------------------------------------------------------------------
# Kernel bodies
# ----------------------------------------------------------------------------------
def _bn_relu(h):
    # Training-mode BatchNorm1d (batch stats, biased variance, gamma=1/beta=0) + ReLU.
    mean = jnp.mean(h, axis=0, keepdims=True)
    c = h - mean
    var = jnp.mean(c * c, axis=0, keepdims=True)
    return jnp.maximum(c * jax.lax.rsqrt(var + BN_EPS), 0.0)


def _forward_block(x, p_ref, C, O):
    # Static sub-views of the packed parameter slab.
    w1t = p_ref[0:C, 0:C]
    w2t = p_ref[C:2 * C, 0:C]
    wct = p_ref[2 * C:3 * C, 0:O]
    bc = p_ref[3 * C:3 * C + 1, 0:O]

    h = jnp.dot(x, w1t, preferred_element_type=jnp.float32, precision=_HIGH)
    h = _bn_relu(h)
    h = jnp.dot(h, w2t, preferred_element_type=jnp.float32, precision=_HIGH)
    h = _bn_relu(h)
    logits = jnp.dot(h, wct, preferred_element_type=jnp.float32, precision=_HIGH) + bc

    # softmax(dim=1) with exact division (approx reciprocal saves nothing here and
    # its error exceeds the verification tolerance).
    m = jnp.max(logits, axis=1, keepdims=True)
    e = jnp.exp(logits - m)
    return e / jnp.sum(e, axis=1, keepdims=True)


def model_kernel(x_ref, p_ref, out_ref, *, C, O):
    out_ref[...] = _forward_block(x_ref[...], p_ref, C, O).astype(out_ref.dtype)


def model_kernel_batched(x_ref, p_ref, out_ref, *, C, O):
    out_ref[0] = _forward_block(x_ref[0], p_ref, C, O).astype(out_ref.dtype)


def _cost(n_blocks, B, C, O, packed_size):
    flops = 2 * n_blocks * B * C * (2 * C + O)
    transcendentals = n_blocks * B * (O + 2 * C)      # exp + rsqrt-class ops
    bytes_accessed = 4 * (n_blocks * B * (C + O) + packed_size)
    return pl.CostEstimate(flops=flops, transcendentals=transcendentals,
                           bytes_accessed=bytes_accessed)


# ----------------------------------------------------------------------------------
# Wrappers
# ----------------------------------------------------------------------------------
@functools.partial(jax.jit, static_argnames=("out_dim",))
def model_forward(x, packed, *, out_dim):
    """Single (B, C) problem; the whole working set is one VMEM-resident block."""
    B, C = x.shape
    vmem = pl.BlockSpec(memory_space=pltpu.MemorySpace.VMEM)
    return pl.pallas_call(
        functools.partial(model_kernel, C=C, O=out_dim),
        out_shape=jax.ShapeDtypeStruct((B, out_dim), jnp.float32),
        in_specs=[vmem, vmem],
        out_specs=vmem,
        cost_estimate=_cost(1, B, C, out_dim, packed.size),
    )(x, packed)


@functools.partial(jax.jit, static_argnames=("out_dim",))
def model_forward_batched(xs, packed, *, out_dim):
    """N independent (B, C) problems in one gridded call: xs is (N, B, C).

    BatchNorm statistics are computed per B-row block (identical semantics per
    problem).  One pallas_call amortizes dispatch, keeps the weight slab
    VMEM-resident across grid steps, and the "parallel" axis shards across the two
    TensorCores on v7x.
    """
    N, B, C = xs.shape
    grid_spec = pltpu.PrefetchScalarGridSpec(
        num_scalar_prefetch=0,
        grid=(N,),
        in_specs=[
            pl.BlockSpec((1, B, C), lambda i: (i, 0, 0)),
            pl.BlockSpec(packed.shape, lambda i: (0, 0)),
        ],
        out_specs=pl.BlockSpec((1, B, out_dim), lambda i: (i, 0, 0)),
    )
    return pl.pallas_call(
        functools.partial(model_kernel_batched, C=C, O=out_dim),
        out_shape=jax.ShapeDtypeStruct((N, B, out_dim), jnp.float32),
        grid_spec=grid_spec,
        compiler_params=pltpu.CompilerParams(dimension_semantics=("parallel",)),
        cost_estimate=_cost(N, B, C, out_dim, packed.size),
    )(xs, packed)


# ----------------------------------------------------------------------------------
# Pure-JAX reference (mirrors the PyTorch module, training-mode BN)
# ----------------------------------------------------------------------------------
def reference_forward(x, w1, b1, w2, b2, wc, bc):
    h = jnp.dot(x, w1.T, precision=_HIGH) + b1
    h = (h - h.mean(0)) / jnp.sqrt(h.var(0) + BN_EPS)
    h = jnp.maximum(h, 0.0)
    h = jnp.dot(h, w2.T, precision=_HIGH) + b2
    h = (h - h.mean(0)) / jnp.sqrt(h.var(0) + BN_EPS)
    h = jnp.maximum(h, 0.0)
    logits = jnp.dot(h, wc.T, precision=_HIGH) + bc
    return jax.nn.softmax(logits, axis=1)


if __name__ == "__main__":
    # Small shapes consistent with Model(out_dim, in_channel): batch=8, in_channel=32, out_dim=8
    B, C, O = 8, 32, 8

    key = jax.random.PRNGKey(0)
    kx, kxs, k1, k2, kc = jax.random.split(key, 5)

    x = jax.random.normal(kx, (B, C), dtype=jnp.float32)

    # Linear weights ~ N(0, 0.02), biases zero (per _initialize_weights).
    w1 = 0.02 * jax.random.normal(k1, (C, C), dtype=jnp.float32)
    b1 = jnp.zeros((C,), dtype=jnp.float32)
    w2 = 0.02 * jax.random.normal(k2, (C, C), dtype=jnp.float32)
    b2 = jnp.zeros((C,), dtype=jnp.float32)
    wc = 0.02 * jax.random.normal(kc, (O, C), dtype=jnp.float32)
    bc = jnp.zeros((O,), dtype=jnp.float32)

    # One-time layout prep (transposes / packing happen here, not per call).
    packed = prepare_params(w1, b1, w2, b2, wc, bc)

    # --- single-block call ---
    out = model_forward(x, packed, out_dim=O)
    jax.block_until_ready(out)
    ref = reference_forward(x, w1, b1, w2, b2, wc, bc)
    assert out.shape == (B, O)
    assert jnp.allclose(out, ref, atol=2e-5, rtol=2e-5), "mismatch vs pure-JAX reference"
    assert jnp.allclose(jnp.sum(out, axis=1), 1.0, atol=1e-5), "softmax rows must sum to 1"

    # --- batched call: N independent 8-row problems in one gridded pallas_call ---
    N = 4
    xs = jax.random.normal(kxs, (N, B, C), dtype=jnp.float32)
    outs = model_forward_batched(xs, packed, out_dim=O)
    jax.block_until_ready(outs)
    refs = jnp.stack([reference_forward(xs[i], w1, b1, w2, b2, wc, bc) for i in range(N)])
    assert outs.shape == (N, B, O)
    assert jnp.allclose(outs, refs, atol=2e-5, rtol=2e-5), "batched mismatch vs reference"

    print("KERNEL_OK")
</pallas_src>

<mosaic_0001>
module attributes {stable_mosaic.version = 11 : i64} {
  func.func @model_kernel(%arg0: memref<8x32xf32, #tpu.memory_space<vmem>>, %arg1: memref<104x128xf32, #tpu.memory_space<vmem>>, %arg2: memref<8x8xf32, #tpu.memory_space<vmem>>) attributes {dimension_semantics = [], scalar_prefetch = 0 : i64, scratch_operands = 0 : i64, tpu.core_type = #tpu.core_type<tc>} {
    %c0 = arith.constant 0 : index
    %c0_0 = arith.constant 0 : index
    %0 = vector.load %arg0[%c0, %c0_0] : memref<8x32xf32, #tpu.memory_space<vmem>>, vector<8x32xf32>
    %c0_1 = arith.constant 0 : index
    %c0_2 = arith.constant 0 : index
    %1 = vector.load %arg1[%c0_1, %c0_2] : memref<104x128xf32, #tpu.memory_space<vmem>>, vector<32x32xf32>
    %c32 = arith.constant 32 : index
    %c0_3 = arith.constant 0 : index
    %2 = vector.load %arg1[%c32, %c0_3] : memref<104x128xf32, #tpu.memory_space<vmem>>, vector<32x32xf32>
    %c64 = arith.constant 64 : index
    %c0_4 = arith.constant 0 : index
    %3 = vector.load %arg1[%c64, %c0_4] : memref<104x128xf32, #tpu.memory_space<vmem>>, vector<32x8xf32>
    %c96 = arith.constant 96 : index
    %c0_5 = arith.constant 0 : index
    %4 = vector.load %arg1[%c96, %c0_5] : memref<104x128xf32, #tpu.memory_space<vmem>>, vector<1x8xf32>
    %cst = arith.constant dense<0.000000e+00> : vector<8x32xf32>
    %5 = tpu.matmul %0, %1, %cst {dimension_numbers = #tpu.dot_dimension_numbers<[1], [0], [0], [1], [0, 0, 1, 1], [], []>, precision = #tpu.contract_precision<fp32>} : vector<8x32xf32>, vector<32x32xf32>, vector<8x32xf32> -> vector<8x32xf32>
    %cst_6 = arith.constant dense<0.000000e+00> : vector<32xf32>
    %6 = vector.multi_reduction <add>, %5, %cst_6 [0] : vector<8x32xf32> to vector<32xf32>
    %7 = vector.shape_cast %6 : vector<32xf32> to vector<1x32xf32>
    %cst_7 = arith.constant 8.000000e+00 : f32
    %8 = vector.broadcast %cst_7 : f32 to vector<1x32xf32>
    %9 = arith.divf %7, %8 : vector<1x32xf32>
    %10 = vector.broadcast %9 : vector<1x32xf32> to vector<8x32xf32>
    %11 = arith.subf %5, %10 : vector<8x32xf32>
    %12 = arith.mulf %11, %11 : vector<8x32xf32>
    %cst_8 = arith.constant dense<0.000000e+00> : vector<32xf32>
    %13 = vector.multi_reduction <add>, %12, %cst_8 [0] : vector<8x32xf32> to vector<32xf32>
    %14 = vector.shape_cast %13 : vector<32xf32> to vector<1x32xf32>
    %cst_9 = arith.constant 8.000000e+00 : f32
    %15 = vector.broadcast %cst_9 : f32 to vector<1x32xf32>
    %16 = arith.divf %14, %15 : vector<1x32xf32>
    %cst_10 = arith.constant 9.99999974E-6 : f32
    %17 = vector.broadcast %cst_10 : f32 to vector<1x32xf32>
    %18 = arith.addf %16, %17 : vector<1x32xf32>
    %19 = math.rsqrt %18 : vector<1x32xf32>
    %20 = vector.broadcast %19 : vector<1x32xf32> to vector<8x32xf32>
    %21 = arith.mulf %11, %20 : vector<8x32xf32>
    %cst_11 = arith.constant 0.000000e+00 : f32
    %22 = vector.broadcast %cst_11 : f32 to vector<8x32xf32>
    %23 = arith.maximumf %21, %22 : vector<8x32xf32>
    %cst_12 = arith.constant dense<0.000000e+00> : vector<8x32xf32>
    %24 = tpu.matmul %23, %2, %cst_12 {dimension_numbers = #tpu.dot_dimension_numbers<[1], [0], [0], [1], [0, 0, 1, 1], [], []>, precision = #tpu.contract_precision<fp32>} : vector<8x32xf32>, vector<32x32xf32>, vector<8x32xf32> -> vector<8x32xf32>
    %cst_13 = arith.constant dense<0.000000e+00> : vector<32xf32>
    %25 = vector.multi_reduction <add>, %24, %cst_13 [0] : vector<8x32xf32> to vector<32xf32>
    %26 = vector.shape_cast %25 : vector<32xf32> to vector<1x32xf32>
    %cst_14 = arith.constant 8.000000e+00 : f32
    %27 = vector.broadcast %cst_14 : f32 to vector<1x32xf32>
    %28 = arith.divf %26, %27 : vector<1x32xf32>
    %29 = vector.broadcast %28 : vector<1x32xf32> to vector<8x32xf32>
    %30 = arith.subf %24, %29 : vector<8x32xf32>
    %31 = arith.mulf %30, %30 : vector<8x32xf32>
    %cst_15 = arith.constant dense<0.000000e+00> : vector<32xf32>
    %32 = vector.multi_reduction <add>, %31, %cst_15 [0] : vector<8x32xf32> to vector<32xf32>
    %33 = vector.shape_cast %32 : vector<32xf32> to vector<1x32xf32>
    %cst_16 = arith.constant 8.000000e+00 : f32
    %34 = vector.broadcast %cst_16 : f32 to vector<1x32xf32>
    %35 = arith.divf %33, %34 : vector<1x32xf32>
    %cst_17 = arith.constant 9.99999974E-6 : f32
    %36 = vector.broadcast %cst_17 : f32 to vector<1x32xf32>
    %37 = arith.addf %35, %36 : vector<1x32xf32>
    %38 = math.rsqrt %37 : vector<1x32xf32>
    %39 = vector.broadcast %38 : vector<1x32xf32> to vector<8x32xf32>
    %40 = arith.mulf %30, %39 : vector<8x32xf32>
    %cst_18 = arith.constant 0.000000e+00 : f32
    %41 = vector.broadcast %cst_18 : f32 to vector<8x32xf32>
    %42 = arith.maximumf %40, %41 : vector<8x32xf32>
    %cst_19 = arith.constant dense<0.000000e+00> : vector<8x8xf32>
    %43 = tpu.matmul %42, %3, %cst_19 {dimension_numbers = #tpu.dot_dimension_numbers<[1], [0], [0], [1], [0, 0, 1, 1], [], []>, precision = #tpu.contract_precision<fp32>} : vector<8x32xf32>, vector<32x8xf32>, vector<8x8xf32> -> vector<8x8xf32>
    %44 = vector.broadcast %4 : vector<1x8xf32> to vector<8x8xf32>
    %45 = arith.addf %43, %44 : vector<8x8xf32>
    %cst_20 = arith.constant dense<0xFF800000> : vector<8xf32>
    %46 = vector.multi_reduction <maximumf>, %45, %cst_20 [1] : vector<8x8xf32> to vector<8xf32>
    %47 = vector.shape_cast %46 : vector<8xf32> to vector<8x1xf32>
    %48 = vector.broadcast %47 : vector<8x1xf32> to vector<8x8xf32>
    %49 = arith.subf %45, %48 : vector<8x8xf32>
    %50 = math.exp %49 : vector<8x8xf32>
    %cst_21 = arith.constant dense<0.000000e+00> : vector<8xf32>
    %51 = vector.multi_reduction <add>, %50, %cst_21 [1] : vector<8x8xf32> to vector<8xf32>
    %52 = vector.shape_cast %51 : vector<8xf32> to vector<8x1xf32>
    %53 = vector.broadcast %52 : vector<8x1xf32> to vector<8x8xf32>
    %54 = arith.divf %50, %53 : vector<8x8xf32>
    %c0_22 = arith.constant 0 : index
    %c0_23 = arith.constant 0 : index
    %55 = vector.load %arg2[%c0_22, %c0_23] : memref<8x8xf32, #tpu.memory_space<vmem>>, vector<8x8xf32>
    tpu.vector_store %arg2[%c0_22, %c0_23], %54 {strides = array<i32>} : memref<8x8xf32, #tpu.memory_space<vmem>>, vector<8x8xf32>,
    return
  }
}

</mosaic_0001>

<llo_original>
// kernel: model_forward.1
$region0: #{model_forward.1}
  #allocation0 [shape = 'u32[]', space=smem, size = 0x4, offset = 0x4, fixed_abs, tag = 'smem constant byte address 0x4 - core index']
  #allocation1 [shape = 'u32[72,128]{1,0:T(1,128)}', space=vmem, size = 0x9000, scoped, tag = 'internal scratch']
  %s0 = inlined_call_operand.hbm [shape: f32[8,32], index: 0, kind: input, shape index: {}]
  %s1 = inlined_call_operand.hbm [shape: f32[104,128], index: 1, kind: input, shape index: {}]
  %s2 = inlined_call_operand.hbm [shape: f32[8,8], index: 2, kind: output, shape index: {}]
  %s3 = sld [smem:[#allocation0]]
  $region26: #{model_forward.1} parent=0
    _
  %s5 = ssub.s32 1, %s3
  %s6 = scalar_select 0, %s5, %s3
  $region1: #{model_forward.1} parent=0
    #allocation2 [shape = 'u8[4096]{0}', space=vmem, size = 0x1000, scoped, tag = 'input window, operand 0, single buffered']
    #allocation3 [shape = 's32[1]{0}', space=sflag, size = 0x4, scoped, tag = 'scoped memory for model_forward.1']
    #allocation4 [shape = 's32[1]{0}', space=sflag, size = 0x4, scoped, tag = 'scoped memory for model_forward.1']
    #allocation5 [shape = 'u8[53248]{0}', space=vmem, size = 0xd000, scoped, tag = 'input window, operand 1, single buffered']
    #allocation6 [shape = 's32[1]{0}', space=sflag, size = 0x4, scoped, tag = 'scoped memory for model_forward.1']
    #allocation7 [shape = 'u8[4096]{0}', space=vmem, size = 0x1000, scoped, tag = 'output window, operand 0, single buffered']
    %7 = vsyncpa [#allocation3], 0
    %8 = vsyncpa [#allocation6], 0
    %9 = vsyncpa [#allocation4], 0
    // Predicated region
    $region2: #{model_forward.1} parent=1 // pred_check
      _
    $region3: #{model_forward.1} parent=1 // pred_check_branch
      %11 = sbr.rel (0) target = $region5
    $region4: #{model_forward.1} parent=1 // pred_region
      %13 = vsyncadd [#allocation3], 0
      %s15 = sshll.u32 %s0, 4
      %s16 = int_to_ptr.hbm [resolvable:$true] %s15
      %s17 = sshll.u32 [#allocation2], 4
      %s18 = int_to_ptr.vmem [resolvable:$true] %s17
      %20 = dma.hbm_to_vmem [thread:$0]  %s16, 128, %s18, [#allocation3]
    $region5: #{model_forward.1} parent=1 // pred_fallthru
      _
    // Predicated region
    $region6: #{model_forward.1} parent=1 // pred_check
      _
    $region7: #{model_forward.1} parent=1 // pred_check_branch
      %22 = sbr.rel (0) target = $region9
    $region8: #{model_forward.1} parent=1 // pred_region
      %24 = vsyncadd [#allocation6], 0
      %s25 = sshll.u32 %s1, 4
      %s26 = int_to_ptr.hbm [resolvable:$true] %s25
      %s27 = sshll.u32 [#allocation5], 4
      %s28 = int_to_ptr.vmem [resolvable:$true] %s27
      %33 = dma.hbm_to_vmem [thread:$0]  %s26, 1664, %s28, [#allocation6], 128, 128, 8
    $region9: #{model_forward.1} parent=1 // pred_fallthru
      _
    // Predicated region
    $region10: #{model_forward.1} parent=1 // pred_check
      _
    $region11: #{model_forward.1} parent=1 // pred_check_branch
      %35 = sbr.rel (0) target = $region13
    $region12: #{model_forward.1} parent=1 // pred_region
      %37 = dma.done [#allocation3], 128
    $region13: #{model_forward.1} parent=1 // pred_fallthru
      _
    // Predicated region
    $region14: #{model_forward.1} parent=1 // pred_check
      _
    $region15: #{model_forward.1} parent=1 // pred_check_branch
      %39 = sbr.rel (0) target = $region17
    $region16: #{model_forward.1} parent=1 // pred_region
      %41 = dma.done [#allocation6], 1664
    $region17: #{model_forward.1} parent=1 // pred_fallthru
      _
    %v42 = vld [vmem:[#allocation2] sm:$0xff]
    %v43 = vld [vmem:[#allocation5] sm:$0xff]
    %v44 = vld [vmem:[#allocation5 + $0x8] sm:$0xff]
    %v45 = vld [vmem:[#allocation5 + $0x10] sm:$0xff]
    %v46 = vld [vmem:[#allocation5 + $0x18] sm:$0xff]
    %v47 = vld [vmem:[#allocation5 + $0x20] sm:$0xff]
    %v48 = vld [vmem:[#allocation5 + $0x28] sm:$0xff]
    %v49 = vld [vmem:[#allocation5 + $0x30] sm:$0xff]
    %v50 = vld [vmem:[#allocation5 + $0x38] sm:$0xff]
    %v51 = vld [vmem:[#allocation5 + $0x40] sm:$0xff]
    %v52 = vld [vmem:[#allocation5 + $0x48] sm:$0xff]
    %v53 = vld [vmem:[#allocation5 + $0x50] sm:$0xff]
    %v54 = vld [vmem:[#allocation5 + $0x58] sm:$0xff]
    %v55 = vld [vmem:[#allocation5 + $0x60] sm:$0x1]
    %vm56 = vcmask 261120
    %v58 = vsel %vm56, %v42, 0
    %60 = vmatpush.msra.mxu0 0.0
    %61 = vmatpush.msra.mxu0 0.0
    %62 = vmatpush.msra.mxu0 0.0
    %63 = vmatpush.msra.mxu0 0.0
    %64 = vmatpush.msra.mxu0 0.0
    %65 = vmatpush.msra.mxu0 0.0
    %66 = vmatpush.msra.mxu0 0.0
    %67 = vmatpush.msra.mxu0 0.0
    %68 = vmatpush.msra.mxu0 0.0
    %69 = vmatpush.msra.mxu0 0.0
    %70 = vmatpush.msra.mxu0 0.0
    %71 = vmatpush.msra.mxu0 0.0
    %v72 = vand.u32 %v46, 4294901760
    %73 = vmatpush.msra.mxu0 %v72
    %v74 = vand.u32 %v45, 4294901760
    %75 = vmatpush.msra.mxu0 %v74
    %v76 = vand.u32 %v44, 4294901760
    %77 = vmatpush.msra.mxu0 %v76
    %v78 = vand.u32 %v43, 4294901760
    %79 = vmatpush.msra.mxu0 %v78
    %v80 = vand.u32 %v58, 4294901760
    %v81 = vsub.f32 %v58, %v80
    %v82 = vand.u32 %v81, 4294901760
    %v83 = vsub.f32 %v81, %v82
    %v84 = vand.u32 %v83, 4294901760
    %85 = vmatmul.f32.gmra.mxu0 %v84
    %v86 = vpop.f32.mrf.mxu0
    %v87 = vadd.f32 0.0, %v86
    %88 = vdwg.mxu0
    %89 = vmatpush.msra.mxu0 0.0
    %90 = vmatpush.msra.mxu0 0.0
    %91 = vmatpush.msra.mxu0 0.0
    %92 = vmatpush.msra.mxu0 0.0
    %93 = vmatpush.msra.mxu0 0.0
    %94 = vmatpush.msra.mxu0 0.0
    %95 = vmatpush.msra.mxu0 0.0
    %96 = vmatpush.msra.mxu0 0.0
    %97 = vmatpush.msra.mxu0 0.0
    %98 = vmatpush.msra.mxu0 0.0
    %99 = vmatpush.msra.mxu0 0.0
    %100 = vmatpush.msra.mxu0 0.0
    %v101 = vand.u32 %v46, 4294901760
    %v102 = vsub.f32 %v46, %v101
    %v103 = vand.u32 %v102, 4294901760
    %v104 = vsub.f32 %v102, %v103
    %v105 = vand.u32 %v104, 4294901760
    %106 = vmatpush.msra.mxu0 %v105
    %v107 = vand.u32 %v45, 4294901760
    %v108 = vsub.f32 %v45, %v107
    %v109 = vand.u32 %v108, 4294901760
    %v110 = vsub.f32 %v108, %v109
    %v111 = vand.u32 %v110, 4294901760
    %112 = vmatpush.msra.mxu0 %v111
    %v113 = vand.u32 %v44, 4294901760
    %v114 = vsub.f32 %v44, %v113
    %v115 = vand.u32 %v114, 4294901760
    %v116 = vsub.f32 %v114, %v115
    %v117 = vand.u32 %v116, 4294901760
    %118 = vmatpush.msra.mxu0 %v117
    %v119 = vand.u32 %v43, 4294901760
    %v120 = vsub.f32 %v43, %v119
    %v121 = vand.u32 %v120, 4294901760
    %v122 = vsub.f32 %v120, %v121
    %v123 = vand.u32 %v122, 4294901760
    %124 = vmatpush.msra.mxu0 %v123
    %v125 = vand.u32 %v58, 4294901760
    %126 = vmatmul.f32.gmra.mxu0 %v125
    %v127 = vpop.f32.mrf.mxu0
    %v128 = vadd.f32 %v87, %v127
    %129 = vdwg.mxu0
    %130 = vmatpush.msra.mxu0 0.0
    %131 = vmatpush.msra.mxu0 0.0
    %132 = vmatpush.msra.mxu0 0.0
    %133 = vmatpush.msra.mxu0 0.0
    %134 = vmatpush.msra.mxu0 0.0
    %135 = vmatpush.msra.mxu0 0.0
    %136 = vmatpush.msra.mxu0 0.0
    %137 = vmatpush.msra.mxu0 0.0
    %138 = vmatpush.msra.mxu0 0.0
    %139 = vmatpush.msra.mxu0 0.0
    %140 = vmatpush.msra.mxu0 0.0
    %141 = vmatpush.msra.mxu0 0.0
    %v142 = vand.u32 %v46, 4294901760
    %v143 = vsub.f32 %v46, %v142
    %144 = vmatpush.msra.mxu0 %v143
    %v145 = vand.u32 %v45, 4294901760
    %v146 = vsub.f32 %v45, %v145
    %147 = vmatpush.msra.mxu0 %v146
    %v148 = vand.u32 %v44, 4294901760
    %v149 = vsub.f32 %v44, %v148
    %150 = vmatpush.msra.mxu0 %v149
    %v151 = vand.u32 %v43, 4294901760
    %v152 = vsub.f32 %v43, %v151
    %153 = vmatpush.msra.mxu0 %v152
    %v154 = vand.u32 %v58, 4294901760
    %v155 = vsub.f32 %v58, %v154
    %156 = vmatmul.f32.gmra.mxu0 %v155
    %v157 = vpop.f32.mrf.mxu0
    %v158 = vadd.f32 %v128, %v157
    %159 = vdwg.mxu0
    %160 = vmatpush.msra.mxu0 0.0
    %161 = vmatpush.msra.mxu0 0.0
    %162 = vmatpush.msra.mxu0 0.0
    %163 = vmatpush.msra.mxu0 0.0
    %164 = vmatpush.msra.mxu0 0.0
    %165 = vmatpush.msra.mxu0 0.0
    %166 = vmatpush.msra.mxu0 0.0
    %167 = vmatpush.msra.mxu0 0.0
    %168 = vmatpush.msra.mxu0 0.0
    %169 = vmatpush.msra.mxu0 0.0
    %170 = vmatpush.msra.mxu0 0.0
    %171 = vmatpush.msra.mxu0 0.0
    %v172 = vand.u32 %v46, 4294901760
    %173 = vmatpush.msra.mxu0 %v172
    %v174 = vand.u32 %v45, 4294901760
    %175 = vmatpush.msra.mxu0 %v174
    %v176 = vand.u32 %v44, 4294901760
    %177 = vmatpush.msra.mxu0 %v176
    %v178 = vand.u32 %v43, 4294901760
    %179 = vmatpush.msra.mxu0 %v178
    %v180 = vand.u32 %v58, 4294901760
    %v181 = vsub.f32 %v58, %v180
    %v182 = vand.u32 %v181, 4294901760
    %183 = vmatmul.f32.gmra.mxu0 %v182
    %v184 = vpop.f32.mrf.mxu0
    %v185 = vadd.f32 %v158, %v184
    %186 = vdwg.mxu0
    %187 = vmatpush.msra.mxu0 0.0
    %188 = vmatpush.msra.mxu0 0.0
    %189 = vmatpush.msra.mxu0 0.0
    %190 = vmatpush.msra.mxu0 0.0
    %191 = vmatpush.msra.mxu0 0.0
    %192 = vmatpush.msra.mxu0 0.0
    %193 = vmatpush.msra.mxu0 0.0
    %194 = vmatpush.msra.mxu0 0.0
    %195 = vmatpush.msra.mxu0 0.0
    %196 = vmatpush.msra.mxu0 0.0
    %197 = vmatpush.msra.mxu0 0.0
    %198 = vmatpush.msra.mxu0 0.0
    %v199 = vand.u32 %v46, 4294901760
    %v200 = vsub.f32 %v46, %v199
    %v201 = vand.u32 %v200, 4294901760
    %202 = vmatpush.msra.mxu0 %v201
    %v203 = vand.u32 %v45, 4294901760
    %v204 = vsub.f32 %v45, %v203
    %v205 = vand.u32 %v204, 4294901760
    %206 = vmatpush.msra.mxu0 %v205
    %v207 = vand.u32 %v44, 4294901760
    %v208 = vsub.f32 %v44, %v207
    %v209 = vand.u32 %v208, 4294901760
    %210 = vmatpush.msra.mxu0 %v209
    %v211 = vand.u32 %v43, 4294901760
    %v212 = vsub.f32 %v43, %v211
    %v213 = vand.u32 %v212, 4294901760
    %214 = vmatpush.msra.mxu0 %v213
    %v215 = vand.u32 %v58, 4294901760
    %216 = vmatmul.f32.gmra.mxu0 %v215
    %v217 = vpop.f32.mrf.mxu0
    %v218 = vadd.f32 %v185, %v217
    %219 = vdwg.mxu0
    %220 = vmatpush.msra.mxu0 0.0
    %221 = vmatpush.msra.mxu0 0.0
    %222 = vmatpush.msra.mxu0 0.0
    %223 = vmatpush.msra.mxu0 0.0
    %224 = vmatpush.msra.mxu0 0.0
    %225 = vmatpush.msra.mxu0 0.0
    %226 = vmatpush.msra.mxu0 0.0
    %227 = vmatpush.msra.mxu0 0.0
    %228 = vmatpush.msra.mxu0 0.0
    %229 = vmatpush.msra.mxu0 0.0
    %230 = vmatpush.msra.mxu0 0.0
    %231 = vmatpush.msra.mxu0 0.0
    %v232 = vand.u32 %v46, 4294901760
    %233 = vmatpush.msra.mxu0 %v232
    %v234 = vand.u32 %v45, 4294901760
    %235 = vmatpush.msra.mxu0 %v234
    %v236 = vand.u32 %v44, 4294901760
    %237 = vmatpush.msra.mxu0 %v236
    %v238 = vand.u32 %v43, 4294901760
    %239 = vmatpush.msra.mxu0 %v238
    %v240 = vand.u32 %v58, 4294901760
    %241 = vmatmul.f32.gmra.mxu0 %v240
    %v242 = vpop.f32.mrf.mxu0
    %v243 = vadd.f32 %v218, %v242
    %244 = vdwg.mxu0
    %v245 = vsel %vm56, %v243, 0.0
    %v246 = vrot.slane %v245, 4
    %v247 = vadd.f32 %v245, %v246
    %v248 = vrot.slane %v247, 2
    %v249 = vadd.f32 %v247, %v248
    %v250 = vrot.slane %v249, 1
    %v251 = vadd.f32 %v249, %v250
    %v252 = vrcp.pop 8.0
    %v253 = vmul.f32 8.0, %v252
    %v254 = vsub.f32 1.0, %v253
    %v255 = vmul.f32 %v252, %v254
    %v256 = vadd.f32 %v252, %v255
    %vm257 = vweird.f32 %v252
    %v258 = vsel %vm257, %v252, %v256
    %v259 = vmul.f32 %v251, %v258
    %v260 = vsub.f32 %v243, %v259
    %v261 = vmul.f32 %v260, %v260
    %v262 = vsel %vm56, %v261, 0.0
    %v263 = vrot.slane %v262, 4
    %v264 = vadd.f32 %v262, %v263
    %v265 = vrot.slane %v264, 2
    %v266 = vadd.f32 %v264, %v265
    %v267 = vrot.slane %v266, 1
    %v268 = vadd.f32 %v266, %v267
    %v269 = vmul.f32 %v268, %v258
    %v270 = vadd.f32 %v269, 1e-05
    %v271 = vrsqrt.pop %v270
    %v272 = vmul.f32 %v271, %v270
    %v273 = vmul.f32 %v272, %v271
    %v274 = vmul.f32 0.5, %v273
    %v275 = vsub.f32 1.5, %v274
    %v276 = vmul.f32 %v271, %v275
    %vm277 = vweird.f32 %v270
    %vm278 = vweird.f32 %v271
    %vm279 = vmor %vm277, %vm278
    %v280 = vsel %vm279, %v271, %v276
    %v281 = vmul.f32 %v260, %v280
    %v282 = vmax.f32 %v281, 0.0
    %v284 = vsel %vm56, %v282, 0
    %286 = vmatpush.msra.mxu0 0.0
    %287 = vmatpush.msra.mxu0 0.0
    %288 = vmatpush.msra.mxu0 0.0
    %289 = vmatpush.msra.mxu0 0.0
    %290 = vmatpush.msra.mxu0 0.0
    %291 = vmatpush.msra.mxu0 0.0
    %292 = vmatpush.msra.mxu0 0.0
    %293 = vmatpush.msra.mxu0 0.0
    %294 = vmatpush.msra.mxu0 0.0
    %295 = vmatpush.msra.mxu0 0.0
    %296 = vmatpush.msra.mxu0 0.0
    %297 = vmatpush.msra.mxu0 0.0
    %v298 = vand.u32 %v50, 4294901760
    %299 = vmatpush.msra.mxu0 %v298
    %v300 = vand.u32 %v49, 4294901760
    %301 = vmatpush.msra.mxu0 %v300
    %v302 = vand.u32 %v48, 4294901760
    %303 = vmatpush.msra.mxu0 %v302
    %v304 = vand.u32 %v47, 4294901760
    %305 = vmatpush.msra.mxu0 %v304
    %v306 = vand.u32 %v284, 4294901760
    %v307 = vsub.f32 %v284, %v306
    %v308 = vand.u32 %v307, 4294901760
    %v309 = vsub.f32 %v307, %v308
    %v310 = vand.u32 %v309, 4294901760
    %311 = vmatmul.f32.gmra.mxu0 %v310
    %v312 = vpop.f32.mrf.mxu0
    %v313 = vadd.f32 0.0, %v312
    %314 = vdwg.mxu0
    %315 = vmatpush.msra.mxu0 0.0
    %316 = vmatpush.msra.mxu0 0.0
    %317 = vmatpush.msra.mxu0 0.0
    %318 = vmatpush.msra.mxu0 0.0
    %319 = vmatpush.msra.mxu0 0.0
    %320 = vmatpush.msra.mxu0 0.0
    %321 = vmatpush.msra.mxu0 0.0
    %322 = vmatpush.msra.mxu0 0.0
    %323 = vmatpush.msra.mxu0 0.0
    %324 = vmatpush.msra.mxu0 0.0
    %325 = vmatpush.msra.mxu0 0.0
    %326 = vmatpush.msra.mxu0 0.0
    %v327 = vand.u32 %v50, 4294901760
    %v328 = vsub.f32 %v50, %v327
    %v329 = vand.u32 %v328, 4294901760
    %v330 = vsub.f32 %v328, %v329
    %v331 = vand.u32 %v330, 4294901760
    %332 = vmatpush.msra.mxu0 %v331
    %v333 = vand.u32 %v49, 4294901760
    %v334 = vsub.f32 %v49, %v333
    %v335 = vand.u32 %v334, 4294901760
    %v336 = vsub.f32 %v334, %v335
    %v337 = vand.u32 %v336, 4294901760
    %338 = vmatpush.msra.mxu0 %v337
    %v339 = vand.u32 %v48, 4294901760
    %v340 = vsub.f32 %v48, %v339
    %v341 = vand.u32 %v340, 4294901760
    %v342 = vsub.f32 %v340, %v341
    %v343 = vand.u32 %v342, 4294901760
    %344 = vmatpush.msra.mxu0 %v343
    %v345 = vand.u32 %v47, 4294901760
    %v346 = vsub.f32 %v47, %v345
    %v347 = vand.u32 %v346, 4294901760
    %v348 = vsub.f32 %v346, %v347
    %v349 = vand.u32 %v348, 4294901760
    %350 = vmatpush.msra.mxu0 %v349
    %v351 = vand.u32 %v284, 4294901760
    %352 = vmatmul.f32.gmra.mxu0 %v351
    %v353 = vpop.f32.mrf.mxu0
    %v354 = vadd.f32 %v313, %v353
    %355 = vdwg.mxu0
    %356 = vmatpush.msra.mxu0 0.0
    %357 = vmatpush.msra.mxu0 0.0
    %358 = vmatpush.msra.mxu0 0.0
    %359 = vmatpush.msra.mxu0 0.0
    %360 = vmatpush.msra.mxu0 0.0
    %361 = vmatpush.msra.mxu0 0.0
    %362 = vmatpush.msra.mxu0 0.0
    %363 = vmatpush.msra.mxu0 0.0
    %364 = vmatpush.msra.mxu0 0.0
    %365 = vmatpush.msra.mxu0 0.0
    %366 = vmatpush.msra.mxu0 0.0
    %367 = vmatpush.msra.mxu0 0.0
    %v368 = vand.u32 %v50, 4294901760
    %v369 = vsub.f32 %v50, %v368
    %370 = vmatpush.msra.mxu0 %v369
    %v371 = vand.u32 %v49, 4294901760
    %v372 = vsub.f32 %v49, %v371
    %373 = vmatpush.msra.mxu0 %v372
    %v374 = vand.u32 %v48, 4294901760
    %v375 = vsub.f32 %v48, %v374
    %376 = vmatpush.msra.mxu0 %v375
    %v377 = vand.u32 %v47, 4294901760
    %v378 = vsub.f32 %v47, %v377
    %379 = vmatpush.msra.mxu0 %v378
    %v380 = vand.u32 %v284, 4294901760
    %v381 = vsub.f32 %v284, %v380
    %382 = vmatmul.f32.gmra.mxu0 %v381
    %v383 = vpop.f32.mrf.mxu0
    %v384 = vadd.f32 %v354, %v383
    %385 = vdwg.mxu0
    %386 = vmatpush.msra.mxu0 0.0
    %387 = vmatpush.msra.mxu0 0.0
    %388 = vmatpush.msra.mxu0 0.0
    %389 = vmatpush.msra.mxu0 0.0
    %390 = vmatpush.msra.mxu0 0.0
    %391 = vmatpush.msra.mxu0 0.0
    %392 = vmatpush.msra.mxu0 0.0
    %393 = vmatpush.msra.mxu0 0.0
    %394 = vmatpush.msra.mxu0 0.0
    %395 = vmatpush.msra.mxu0 0.0
    %396 = vmatpush.msra.mxu0 0.0
    %397 = vmatpush.msra.mxu0 0.0
    %v398 = vand.u32 %v50, 4294901760
    %399 = vmatpush.msra.mxu0 %v398
    %v400 = vand.u32 %v49, 4294901760
    %401 = vmatpush.msra.mxu0 %v400
    %v402 = vand.u32 %v48, 4294901760
    %403 = vmatpush.msra.mxu0 %v402
    %v404 = vand.u32 %v47, 4294901760
    %405 = vmatpush.msra.mxu0 %v404
    %v406 = vand.u32 %v284, 4294901760
    %v407 = vsub.f32 %v284, %v406
    %v408 = vand.u32 %v407, 4294901760
    %409 = vmatmul.f32.gmra.mxu0 %v408
    %v410 = vpop.f32.mrf.mxu0
    %v411 = vadd.f32 %v384, %v410
    %412 = vdwg.mxu0
    %413 = vmatpush.msra.mxu0 0.0
    %414 = vmatpush.msra.mxu0 0.0
    %415 = vmatpush.msra.mxu0 0.0
    %416 = vmatpush.msra.mxu0 0.0
    %417 = vmatpush.msra.mxu0 0.0
    %418 = vmatpush.msra.mxu0 0.0
    %419 = vmatpush.msra.mxu0 0.0
    %420 = vmatpush.msra.mxu0 0.0
    %421 = vmatpush.msra.mxu0 0.0
    %422 = vmatpush.msra.mxu0 0.0
    %423 = vmatpush.msra.mxu0 0.0
    %424 = vmatpush.msra.mxu0 0.0
    %v425 = vand.u32 %v50, 4294901760
    %v426 = vsub.f32 %v50, %v425
    %v427 = vand.u32 %v426, 4294901760
    %428 = vmatpush.msra.mxu0 %v427
    %v429 = vand.u32 %v49, 4294901760
    %v430 = vsub.f32 %v49, %v429
    %v431 = vand.u32 %v430, 4294901760
    %432 = vmatpush.msra.mxu0 %v431
    %v433 = vand.u32 %v48, 4294901760
    %v434 = vsub.f32 %v48, %v433
    %v435 = vand.u32 %v434, 4294901760
    %436 = vmatpush.msra.mxu0 %v435
    %v437 = vand.u32 %v47, 4294901760
    %v438 = vsub.f32 %v47, %v437
    %v439 = vand.u32 %v438, 4294901760
    %440 = vmatpush.msra.mxu0 %v439
    %v441 = vand.u32 %v284, 4294901760
    %442 = vmatmul.f32.gmra.mxu0 %v441
    %v443 = vpop.f32.mrf.mxu0
    %v444 = vadd.f32 %v411, %v443
    %445 = vdwg.mxu0
    %446 = vmatpush.msra.mxu0 0.0
    %447 = vmatpush.msra.mxu0 0.0
    %448 = vmatpush.msra.mxu0 0.0
    %449 = vmatpush.msra.mxu0 0.0
    %450 = vmatpush.msra.mxu0 0.0
    %451 = vmatpush.msra.mxu0 0.0
    %452 = vmatpush.msra.mxu0 0.0
    %453 = vmatpush.msra.mxu0 0.0
    %454 = vmatpush.msra.mxu0 0.0
    %455 = vmatpush.msra.mxu0 0.0
    %456 = vmatpush.msra.mxu0 0.0
    %457 = vmatpush.msra.mxu0 0.0
    %v458 = vand.u32 %v50, 4294901760
    %459 = vmatpush.msra.mxu0 %v458
    %v460 = vand.u32 %v49, 4294901760
    %461 = vmatpush.msra.mxu0 %v460
    %v462 = vand.u32 %v48, 4294901760
    %463 = vmatpush.msra.mxu0 %v462
    %v464 = vand.u32 %v47, 4294901760
    %465 = vmatpush.msra.mxu0 %v464
    %v466 = vand.u32 %v284, 4294901760
    %467 = vmatmul.f32.gmra.mxu0 %v466
    %v468 = vpop.f32.mrf.mxu0
    %v469 = vadd.f32 %v444, %v468
    %470 = vdwg.mxu0
    %v471 = vsel %vm56, %v469, 0.0
    %v472 = vrot.slane %v471, 4
    %v473 = vadd.f32 %v471, %v472
    %v474 = vrot.slane %v473, 2
    %v475 = vadd.f32 %v473, %v474
    %v476 = vrot.slane %v475, 1
    %v477 = vadd.f32 %v475, %v476
    %v478 = vmul.f32 %v477, %v258
    %v479 = vsub.f32 %v469, %v478
    %v480 = vmul.f32 %v479, %v479
    %v481 = vsel %vm56, %v480, 0.0
    %v482 = vrot.slane %v481, 4
    %v483 = vadd.f32 %v481, %v482
    %v484 = vrot.slane %v483, 2
    %v485 = vadd.f32 %v483, %v484
    %v486 = vrot.slane %v485, 1
    %v487 = vadd.f32 %v485, %v486
    %v488 = vmul.f32 %v487, %v258
    %v489 = vadd.f32 %v488, 1e-05
    %v490 = vrsqrt.pop %v489
    %v491 = vmul.f32 %v490, %v489
    %v492 = vmul.f32 %v491, %v490
    %v493 = vmul.f32 0.5, %v492
    %v494 = vsub.f32 1.5, %v493
    %v495 = vmul.f32 %v490, %v494
    %vm496 = vweird.f32 %v489
    %vm497 = vweird.f32 %v490
    %vm498 = vmor %vm496, %vm497
    %v499 = vsel %vm498, %v490, %v495
    %v500 = vmul.f32 %v479, %v499
    %v501 = vmax.f32 %v500, 0.0
    %v502 = vperm.slane %v55, 0
    %v504 = vsel %vm56, %v501, 0
    %506 = vmatpush.msra.mxu0 0.0
    %507 = vmatpush.msra.mxu0 0.0
    %508 = vmatpush.msra.mxu0 0.0
    %509 = vmatpush.msra.mxu0 0.0
    %510 = vmatpush.msra.mxu0 0.0
    %511 = vmatpush.msra.mxu0 0.0
    %512 = vmatpush.msra.mxu0 0.0
    %513 = vmatpush.msra.mxu0 0.0
    %514 = vmatpush.msra.mxu0 0.0
    %515 = vmatpush.msra.mxu0 0.0
    %516 = vmatpush.msra.mxu0 0.0
    %517 = vmatpush.msra.mxu0 0.0
    %v518 = vand.u32 %v54, 4294901760
    %519 = vmatpush.msra.mxu0 %v518
    %v520 = vand.u32 %v53, 4294901760
    %521 = vmatpush.msra.mxu0 %v520
    %v522 = vand.u32 %v52, 4294901760
    %523 = vmatpush.msra.mxu0 %v522
    %v524 = vand.u32 %v51, 4294901760
    %525 = vmatpush.msra.mxu0 %v524
    %v526 = vand.u32 %v504, 4294901760
    %v527 = vsub.f32 %v504, %v526
    %v528 = vand.u32 %v527, 4294901760
    %v529 = vsub.f32 %v527, %v528
    %v530 = vand.u32 %v529, 4294901760
    %531 = vmatmul.f32.gmra.mxu0 %v530
    %v532 = vpop.f32.mrf.mxu0
    %v533 = vadd.f32 %v502, %v532
    %534 = vdwg.mxu0
    %535 = vmatpush.msra.mxu0 0.0
    %536 = vmatpush.msra.mxu0 0.0
    %537 = vmatpush.msra.mxu0 0.0
    %538 = vmatpush.msra.mxu0 0.0
    %539 = vmatpush.msra.mxu0 0.0
    %540 = vmatpush.msra.mxu0 0.0
    %541 = vmatpush.msra.mxu0 0.0
    %542 = vmatpush.msra.mxu0 0.0
    %543 = vmatpush.msra.mxu0 0.0
    %544 = vmatpush.msra.mxu0 0.0
    %545 = vmatpush.msra.mxu0 0.0
    %546 = vmatpush.msra.mxu0 0.0
    %v547 = vand.u32 %v54, 4294901760
    %v548 = vsub.f32 %v54, %v547
    %v549 = vand.u32 %v548, 4294901760
    %v550 = vsub.f32 %v548, %v549
    %v551 = vand.u32 %v550, 4294901760
    %552 = vmatpush.msra.mxu0 %v551
    %v553 = vand.u32 %v53, 4294901760
    %v554 = vsub.f32 %v53, %v553
    %v555 = vand.u32 %v554, 4294901760
    %v556 = vsub.f32 %v554, %v555
    %v557 = vand.u32 %v556, 4294901760
    %558 = vmatpush.msra.mxu0 %v557
    %v559 = vand.u32 %v52, 4294901760
    %v560 = vsub.f32 %v52, %v559
    %v561 = vand.u32 %v560, 4294901760
    %v562 = vsub.f32 %v560, %v561
    %v563 = vand.u32 %v562, 4294901760
    %564 = vmatpush.msra.mxu0 %v563
    %v565 = vand.u32 %v51, 4294901760
    %v566 = vsub.f32 %v51, %v565
    %v567 = vand.u32 %v566, 4294901760
    %v568 = vsub.f32 %v566, %v567
    %v569 = vand.u32 %v568, 4294901760
    %570 = vmatpush.msra.mxu0 %v569
    %v571 = vand.u32 %v504, 4294901760
    %572 = vmatmul.f32.gmra.mxu0 %v571
    %v573 = vpop.f32.mrf.mxu0
    %v574 = vadd.f32 %v533, %v573
    %575 = vdwg.mxu0
    %576 = vmatpush.msra.mxu0 0.0
    %577 = vmatpush.msra.mxu0 0.0
    %578 = vmatpush.msra.mxu0 0.0
    %579 = vmatpush.msra.mxu0 0.0
    %580 = vmatpush.msra.mxu0 0.0
    %581 = vmatpush.msra.mxu0 0.0
    %582 = vmatpush.msra.mxu0 0.0
    %583 = vmatpush.msra.mxu0 0.0
    %584 = vmatpush.msra.mxu0 0.0
    %585 = vmatpush.msra.mxu0 0.0
    %586 = vmatpush.msra.mxu0 0.0
    %587 = vmatpush.msra.mxu0 0.0
    %v588 = vand.u32 %v54, 4294901760
    %v589 = vsub.f32 %v54, %v588
    %590 = vmatpush.msra.mxu0 %v589
    %v591 = vand.u32 %v53, 4294901760
    %v592 = vsub.f32 %v53, %v591
    %593 = vmatpush.msra.mxu0 %v592
    %v594 = vand.u32 %v52, 4294901760
    %v595 = vsub.f32 %v52, %v594
    %596 = vmatpush.msra.mxu0 %v595
    %v597 = vand.u32 %v51, 4294901760
    %v598 = vsub.f32 %v51, %v597
    %599 = vmatpush.msra.mxu0 %v598
    %v600 = vand.u32 %v504, 4294901760
    %v601 = vsub.f32 %v504, %v600
    %602 = vmatmul.f32.gmra.mxu0 %v601
    %v603 = vpop.f32.mrf.mxu0
    %v604 = vadd.f32 %v574, %v603
    %605 = vdwg.mxu0
    %606 = vmatpush.msra.mxu0 0.0
    %607 = vmatpush.msra.mxu0 0.0
    %608 = vmatpush.msra.mxu0 0.0
    %609 = vmatpush.msra.mxu0 0.0
    %610 = vmatpush.msra.mxu0 0.0
    %611 = vmatpush.msra.mxu0 0.0
    %612 = vmatpush.msra.mxu0 0.0
    %613 = vmatpush.msra.mxu0 0.0
    %614 = vmatpush.msra.mxu0 0.0
    %615 = vmatpush.msra.mxu0 0.0
    %616 = vmatpush.msra.mxu0 0.0
    %617 = vmatpush.msra.mxu0 0.0
    %v618 = vand.u32 %v54, 4294901760
    %619 = vmatpush.msra.mxu0 %v618
    %v620 = vand.u32 %v53, 4294901760
    %621 = vmatpush.msra.mxu0 %v620
    %v622 = vand.u32 %v52, 4294901760
    %623 = vmatpush.msra.mxu0 %v622
    %v624 = vand.u32 %v51, 4294901760
    %625 = vmatpush.msra.mxu0 %v624
    %v626 = vand.u32 %v504, 4294901760
    %v627 = vsub.f32 %v504, %v626
    %v628 = vand.u32 %v627, 4294901760
    %629 = vmatmul.f32.gmra.mxu0 %v628
    %v630 = vpop.f32.mrf.mxu0
    %v631 = vadd.f32 %v604, %v630
    %632 = vdwg.mxu0
    %633 = vmatpush.msra.mxu0 0.0
    %634 = vmatpush.msra.mxu0 0.0
    %635 = vmatpush.msra.mxu0 0.0
    %636 = vmatpush.msra.mxu0 0.0
    %637 = vmatpush.msra.mxu0 0.0
    %638 = vmatpush.msra.mxu0 0.0
    %639 = vmatpush.msra.mxu0 0.0
    %640 = vmatpush.msra.mxu0 0.0
    %641 = vmatpush.msra.mxu0 0.0
    %642 = vmatpush.msra.mxu0 0.0
    %643 = vmatpush.msra.mxu0 0.0
    %644 = vmatpush.msra.mxu0 0.0
    %v645 = vand.u32 %v54, 4294901760
    %v646 = vsub.f32 %v54, %v645
    %v647 = vand.u32 %v646, 4294901760
    %648 = vmatpush.msra.mxu0 %v647
    %v649 = vand.u32 %v53, 4294901760
    %v650 = vsub.f32 %v53, %v649
    %v651 = vand.u32 %v650, 4294901760
    %652 = vmatpush.msra.mxu0 %v651
    %v653 = vand.u32 %v52, 4294901760
    %v654 = vsub.f32 %v52, %v653
    %v655 = vand.u32 %v654, 4294901760
    %656 = vmatpush.msra.mxu0 %v655
    %v657 = vand.u32 %v51, 4294901760
    %v658 = vsub.f32 %v51, %v657
    %v659 = vand.u32 %v658, 4294901760
    %660 = vmatpush.msra.mxu0 %v659
    %v661 = vand.u32 %v504, 4294901760
    %662 = vmatmul.f32.gmra.mxu0 %v661
    %v663 = vpop.f32.mrf.mxu0
    %v664 = vadd.f32 %v631, %v663
    %665 = vdwg.mxu0
    %666 = vmatpush.msra.mxu0 0.0
    %667 = vmatpush.msra.mxu0 0.0
    %668 = vmatpush.msra.mxu0 0.0
    %669 = vmatpush.msra.mxu0 0.0
    %670 = vmatpush.msra.mxu0 0.0
    %671 = vmatpush.msra.mxu0 0.0
    %672 = vmatpush.msra.mxu0 0.0
    %673 = vmatpush.msra.mxu0 0.0
    %674 = vmatpush.msra.mxu0 0.0
    %675 = vmatpush.msra.mxu0 0.0
    %676 = vmatpush.msra.mxu0 0.0
    %677 = vmatpush.msra.mxu0 0.0
    %v678 = vand.u32 %v54, 4294901760
    %679 = vmatpush.msra.mxu0 %v678
    %v680 = vand.u32 %v53, 4294901760
    %681 = vmatpush.msra.mxu0 %v680
    %v682 = vand.u32 %v52, 4294901760
    %683 = vmatpush.msra.mxu0 %v682
    %v684 = vand.u32 %v51, 4294901760
    %685 = vmatpush.msra.mxu0 %v684
    %v686 = vand.u32 %v504, 4294901760
    %687 = vmatmul.f32.gmra.mxu0 %v686
    %v688 = vpop.f32.mrf.mxu0
    %v689 = vadd.f32 %v664, %v688
    %690 = vdwg.mxu0
    %vm691 = vcmask 64512
    %v692 = vsel %vm691, %v689, -inf
    %693 = vmax.xlane.f32.xlu0 %v692
    %v694 = vpop.xlane.xlu0 %693
    %v695 = vsub.f32 %v689, %v694
    %v696 = vmul.f32 %v695, 1.442695
    %v697 = vpow.pop %v696
    %v698 = vsel %vm691, %v697, 0.0
    %699 = vadd.xlane.f32.xlu0 %v698
    %v700 = vpop.xlane.xlu0 %699
    %v701 = vrcp.pop %v700
    %v702 = vmul.f32 %v700, %v701
    %v703 = vsub.f32 1.0, %v702
    %v704 = vmul.f32 %v701, %v703
    %v705 = vadd.f32 %v701, %v704
    %vm706 = vweird.f32 %v700
    %vm707 = vweird.f32 %v701
    %vm708 = vmor %vm706, %vm707
    %v709 = vsel %vm708, %v701, %v705
    %v710 = vand.u32 2147483647, %v700
    %vm711 = vcmp.eq.f32.partialorder %v710, 8.507059e+37
    %v712 = vand.u32 %v700, 2147483648
    %v713 = vor.u32 1.1754944e-38, %v712
    %v714 = vsel %vm711, %v713, %v709
    %v715 = vmul.f32 %v697, %v714
    %716 = vst.msk [vmem:[#allocation7] sm:$0xff] %vm691, %v715
    // Predicated region
    $region18: #{model_forward.1} parent=1 // pred_check
      _
    $region19: #{model_forward.1} parent=1 // pred_check_branch
      %718 = sbr.rel (0) target = $region21
    $region20: #{model_forward.1} parent=1 // pred_region
      %720 = vsyncadd [#allocation4], 0
      %s722 = sshll.u32 [#allocation7], 4
      %s723 = int_to_ptr.vmem [resolvable:$true] %s722
      %s724 = sshll.u32 %s2, 4
      %s725 = int_to_ptr.hbm [resolvable:$true] %s724
      %727 = dma.vmem_to_hbm [thread:$0]  %s723, 128, %s725, [#allocation4]
    $region21: #{model_forward.1} parent=1 // pred_fallthru
      _
    // Predicated region
    $region22: #{model_forward.1} parent=1 // pred_check
      _
    $region23: #{model_forward.1} parent=1 // pred_check_branch
      %729 = sbr.rel (0) target = $region25
    $region24: #{model_forward.1} parent=1 // pred_region
      %731 = dma.done [#allocation4], 128
    $region25: #{model_forward.1} parent=1 // pred_fallthru
      _
    %732 = vsyncpa [#allocation3], 1
    %733 = vsyncpa [#allocation6], 1
    %734 = vsyncpa [#allocation4], 1

</llo_original>
